<compile_context>
chip_gen: v7x
topology: tpu7x:2x2x1
jax: 0.10.0
libtpu: 0.0.40
codegen_flags: <defaults>
</compile_context>

<pallas_src>
import functools

import jax
import jax.numpy as jnp
from jax import lax
from jax.experimental import pallas as pl
from jax.experimental.pallas import tpu as pltpu


_INV_SQRT2 = 0.7071067811865476  # 1/sqrt(2)

_LANE = 128      # TPU vreg lane width
_SUBLANE = 8     # f32 sublane count


def _round_up(x, m):
    return ((x + m - 1) // m) * m


# ----------------------------- Pallas kernel --------------------------------

def _fused_mlp_kernel(x_ref, *refs, num_layers: int):
    """Full MLP forward: Linear_0, then (GELU, Linear_i) for i=1..L-1.

    refs = (W_0, b_0, W_1, b_1, ..., W_{L-1}, b_{L-1}, out_ref).
    Everything stays in VMEM / vregs; only the final result is stored.
    """
    *wb_refs, o_ref = refs
    x = x_ref[...]  # f32, native dtype (no up-cast)
    for i in range(num_layers):
        if i > 0:
            # Exact GELU (torch.nn.GELU default): 0.5 * x * (1 + erf(x/sqrt(2)))
            x = 0.5 * x * (1.0 + lax.erf(x * _INV_SQRT2))
        w = wb_refs[2 * i][...]
        b = wb_refs[2 * i + 1][...]
        x = jnp.dot(x, w, preferred_element_type=jnp.float32) + b
    o_ref[...] = x.astype(o_ref.dtype)


# ----------------------------- parameters -----------------------------------

def init_mlp_params(key, in_features, out_features, hidden_channels,
                    hidden_layers, dtype=jnp.float32):
    """Deterministic synthetic parameters.

    Layer structure mirrors the torch module:
      Linear(in, hidden), [GELU, Linear(hidden, hidden)] * (hidden_layers-1),
      GELU, Linear(hidden, out)
    Returns a list of (W, b) with W of shape (fan_in, fan_out).
    """
    assert hidden_layers > 0
    dims = [in_features] + [hidden_channels] * hidden_layers + [out_features]
    params = []
    for i in range(len(dims) - 1):
        key, kw, kb = jax.random.split(key, 3)
        fan_in, fan_out = dims[i], dims[i + 1]
        bound = float(fan_in) ** -0.5
        W = jax.random.uniform(kw, (fan_in, fan_out), dtype, -bound, bound)
        b = jax.random.uniform(kb, (1, fan_out), dtype, -bound, bound)
        params.append((W, b))
    return params


def pad_params_for_tpu(params):
    """Zero-pad every (W, b) to lane-aligned (x128) feature dims (exact)."""
    padded = []
    for W, b in params:
        k, n = W.shape
        kp, np_ = _round_up(k, _LANE), _round_up(n, _LANE)
        Wp = jnp.zeros((kp, np_), W.dtype).at[:k, :n].set(W)
        bp = jnp.zeros((1, np_), b.dtype).at[:, :n].set(b)
        padded.append((Wp, bp))
    return padded


# ----------------------------- MLP wrapper -----------------------------------

def mlp_forward(x_nchw, padded_params, out_features):
    """Forward pass: flatten all dims except batch, then the fused MLP kernel."""
    B = x_nchw.shape[0]
    x = x_nchw.reshape(B, -1)  # flatten all dims except batch
    M, K = x.shape

    num_layers = len(padded_params)
    K_pad = padded_params[0][0].shape[0]
    N_pad = padded_params[-1][0].shape[1]
    M_pad = _round_up(max(M, _SUBLANE), _SUBLANE)

    # Zero-pad the activation to sublane/lane-aligned shape (exact).
    x_pad = jnp.zeros((M_pad, K_pad), x.dtype).at[:M, :K].set(x)

    flat = []
    for W, b in padded_params:
        flat.extend([W, b])

    vmem_spec = pl.BlockSpec(memory_space=pltpu.MemorySpace.VMEM)
    out_pad = pl.pallas_call(
        functools.partial(_fused_mlp_kernel, num_layers=num_layers),
        out_shape=jax.ShapeDtypeStruct((M_pad, N_pad), x.dtype),
        in_specs=[vmem_spec] * (1 + len(flat)),
        out_specs=vmem_spec,
    )(x_pad, *flat)

    # TODO(synk): dropout (when dropout_prob is not None) not implemented here;
    # this instantiation uses dropout_prob=None (no dropout layers).
    return out_pad[:B, :out_features]


# ------------------------------- main ----------------------------------------

if __name__ == "__main__":
    key = jax.random.PRNGKey(0)

    # Small, module-consistent shapes.
    in_shape = (4, 16, 16)      # C, H, W
    out_shape = (8,)
    hidden_channels = 32
    hidden_layers = 2
    batch = 2

    in_features = 1
    for d in in_shape:
        in_features *= d
    out_features = 1
    for d in out_shape:
        out_features *= d

    key, kx, kp = jax.random.split(key, 3)
    x = jax.random.normal(kx, (batch,) + in_shape, dtype=jnp.float32)
    params = init_mlp_params(kp, in_features, out_features,
                             hidden_channels, hidden_layers)
    padded_params = pad_params_for_tpu(params)

    out = mlp_forward(x, padded_params, out_features)
    out = jax.block_until_ready(out)

    # Sanity: compare against a plain-JAX reference of the same math.
    ref = x.reshape(batch, -1)
    for i, (W, b) in enumerate(params):
        if i > 0:
            ref = jax.nn.gelu(ref, approximate=False)
        ref = ref @ W + b
    assert out.shape == (batch, out_features)
    assert jnp.allclose(out, ref, atol=1e-4, rtol=1e-4)

    print("KERNEL_OK")
</pallas_src>

<mosaic_0001>
module attributes {stable_mosaic.version = 11 : i64} {
  func.func @_fused_mlp_kernel(%arg0: memref<8x1024xf32, #tpu.memory_space<vmem>>, %arg1: memref<1024x128xf32, #tpu.memory_space<vmem>>, %arg2: memref<1x128xf32, #tpu.memory_space<vmem>>, %arg3: memref<128x128xf32, #tpu.memory_space<vmem>>, %arg4: memref<1x128xf32, #tpu.memory_space<vmem>>, %arg5: memref<128x128xf32, #tpu.memory_space<vmem>>, %arg6: memref<1x128xf32, #tpu.memory_space<vmem>>, %arg7: memref<8x128xf32, #tpu.memory_space<vmem>>) attributes {dimension_semantics = [], scalar_prefetch = 0 : i64, scratch_operands = 0 : i64, tpu.core_type = #tpu.core_type<tc>} {
    %c0 = arith.constant 0 : index
    %c0_0 = arith.constant 0 : index
    %0 = vector.load %arg0[%c0, %c0_0] : memref<8x1024xf32, #tpu.memory_space<vmem>>, vector<8x1024xf32>
    %c0_1 = arith.constant 0 : index
    %c0_2 = arith.constant 0 : index
    %1 = vector.load %arg1[%c0_1, %c0_2] : memref<1024x128xf32, #tpu.memory_space<vmem>>, vector<1024x128xf32>
    %c0_3 = arith.constant 0 : index
    %c0_4 = arith.constant 0 : index
    %2 = vector.load %arg2[%c0_3, %c0_4] : memref<1x128xf32, #tpu.memory_space<vmem>>, vector<1x128xf32>
    %cst = arith.constant dense<0.000000e+00> : vector<8x128xf32>
    %3 = tpu.matmul %0, %1, %cst {dimension_numbers = #tpu.dot_dimension_numbers<[1], [0], [0], [1], [0, 0, 1, 1], [], []>} : vector<8x1024xf32>, vector<1024x128xf32>, vector<8x128xf32> -> vector<8x128xf32>
    %4 = vector.broadcast %2 : vector<1x128xf32> to vector<8x128xf32>
    %5 = arith.addf %3, %4 : vector<8x128xf32>
    %cst_5 = arith.constant 5.000000e-01 : f32
    %6 = vector.broadcast %cst_5 : f32 to vector<8x128xf32>
    %7 = arith.mulf %6, %5 : vector<8x128xf32>
    %cst_6 = arith.constant 0.707106769 : f32
    %8 = vector.broadcast %cst_6 : f32 to vector<8x128xf32>
    %9 = arith.mulf %5, %8 : vector<8x128xf32>
    %10 = math.erf %9 : vector<8x128xf32>
    %cst_7 = arith.constant 1.000000e+00 : f32
    %11 = vector.broadcast %cst_7 : f32 to vector<8x128xf32>
    %12 = arith.addf %11, %10 : vector<8x128xf32>
    %13 = arith.mulf %7, %12 : vector<8x128xf32>
    %c0_8 = arith.constant 0 : index
    %c0_9 = arith.constant 0 : index
    %14 = vector.load %arg3[%c0_8, %c0_9] : memref<128x128xf32, #tpu.memory_space<vmem>>, vector<128x128xf32>
    %c0_10 = arith.constant 0 : index
    %c0_11 = arith.constant 0 : index
    %15 = vector.load %arg4[%c0_10, %c0_11] : memref<1x128xf32, #tpu.memory_space<vmem>>, vector<1x128xf32>
    %cst_12 = arith.constant dense<0.000000e+00> : vector<8x128xf32>
    %16 = tpu.matmul %13, %14, %cst_12 {dimension_numbers = #tpu.dot_dimension_numbers<[1], [0], [0], [1], [0, 0, 1, 1], [], []>} : vector<8x128xf32>, vector<128x128xf32>, vector<8x128xf32> -> vector<8x128xf32>
    %17 = vector.broadcast %15 : vector<1x128xf32> to vector<8x128xf32>
    %18 = arith.addf %16, %17 : vector<8x128xf32>
    %cst_13 = arith.constant 5.000000e-01 : f32
    %19 = vector.broadcast %cst_13 : f32 to vector<8x128xf32>
    %20 = arith.mulf %19, %18 : vector<8x128xf32>
    %cst_14 = arith.constant 0.707106769 : f32
    %21 = vector.broadcast %cst_14 : f32 to vector<8x128xf32>
    %22 = arith.mulf %18, %21 : vector<8x128xf32>
    %23 = math.erf %22 : vector<8x128xf32>
    %cst_15 = arith.constant 1.000000e+00 : f32
    %24 = vector.broadcast %cst_15 : f32 to vector<8x128xf32>
    %25 = arith.addf %24, %23 : vector<8x128xf32>
    %26 = arith.mulf %20, %25 : vector<8x128xf32>
    %c0_16 = arith.constant 0 : index
    %c0_17 = arith.constant 0 : index
    %27 = vector.load %arg5[%c0_16, %c0_17] : memref<128x128xf32, #tpu.memory_space<vmem>>, vector<128x128xf32>
    %c0_18 = arith.constant 0 : index
    %c0_19 = arith.constant 0 : index
    %28 = vector.load %arg6[%c0_18, %c0_19] : memref<1x128xf32, #tpu.memory_space<vmem>>, vector<1x128xf32>
    %cst_20 = arith.constant dense<0.000000e+00> : vector<8x128xf32>
    %29 = tpu.matmul %26, %27, %cst_20 {dimension_numbers = #tpu.dot_dimension_numbers<[1], [0], [0], [1], [0, 0, 1, 1], [], []>} : vector<8x128xf32>, vector<128x128xf32>, vector<8x128xf32> -> vector<8x128xf32>
    %30 = vector.broadcast %28 : vector<1x128xf32> to vector<8x128xf32>
    %31 = arith.addf %29, %30 : vector<8x128xf32>
    %c0_21 = arith.constant 0 : index
    %c0_22 = arith.constant 0 : index
    %32 = vector.load %arg7[%c0_21, %c0_22] : memref<8x128xf32, #tpu.memory_space<vmem>>, vector<8x128xf32>
    tpu.vector_store %arg7[%c0_21, %c0_22], %31 {strides = array<i32>} : memref<8x128xf32, #tpu.memory_space<vmem>>, vector<8x128xf32>,
    return
  }
}

</mosaic_0001>

<llo_original>
// kernel: tpu_custom_call.1
$region0: #{tpu_custom_call.1}
  #allocation0 [shape = 'u32[]', space=smem, size = 0x4, offset = 0x4, fixed_abs, tag = 'smem constant byte address 0x4 - core index']
  #allocation1 [shape = 'u32[144,128]{1,0:T(1,128)}', space=vmem, size = 0x12000, scoped, tag = 'internal scratch']
  %s0 = inlined_call_operand.hbm [shape: f32[8,1024], index: 0, kind: input, shape index: {}]
  %s1 = inlined_call_operand.hbm [shape: f32[1024,128], index: 1, kind: input, shape index: {}]
  %s2 = inlined_call_operand.vmem [shape: f32[1,128], index: 2, kind: input, shape index: {}]
  %s3 = inlined_call_operand.hbm [shape: f32[128,128], index: 3, kind: input, shape index: {}]
  %s4 = inlined_call_operand.vmem [shape: f32[1,128], index: 4, kind: input, shape index: {}]
  %s5 = inlined_call_operand.hbm [shape: f32[128,128], index: 5, kind: input, shape index: {}]
  %s6 = inlined_call_operand.vmem [shape: f32[1,128], index: 6, kind: input, shape index: {}]
  %s7 = inlined_call_operand.hbm [shape: f32[8,128], index: 7, kind: output, shape index: {}]
  %s8 = sld [smem:[#allocation0]]
  $region54: #{tpu_custom_call.1} parent=0
    _
  %s10 = ssub.s32 1, %s8
  %s11 = scalar_select 0, %s10, %s8
  $region1: #{tpu_custom_call.1} parent=0
    #allocation2 [shape = 'u8[32768]{0}', space=vmem, size = 0x8000, scoped, tag = 'input window, operand 0, single buffered']
    #allocation3 [shape = 's32[1]{0}', space=sflag, size = 0x4, scoped, tag = 'scoped memory for tpu_custom_call.1']
    #allocation4 [shape = 's32[1]{0}', space=sflag, size = 0x4, scoped, tag = 'scoped memory for tpu_custom_call.1']
    #allocation5 [shape = 'u8[524288]{0}', space=vmem, size = 0x80000, scoped, tag = 'input window, operand 1, single buffered']
    #allocation6 [shape = 's32[1]{0}', space=sflag, size = 0x4, scoped, tag = 'scoped memory for tpu_custom_call.1']
    #allocation7 [shape = 'u8[65536]{0}', space=vmem, size = 0x10000, scoped, tag = 'input window, operand 3, single buffered']
    #allocation8 [shape = 'u8[65536]{0}', space=vmem, size = 0x10000, scoped, tag = 'input window, operand 5, single buffered']
    #allocation9 [shape = 's32[1]{0}', space=sflag, size = 0x4, scoped, tag = 'scoped memory for tpu_custom_call.1']
    #allocation10 [shape = 'u8[4096]{0}', space=vmem, size = 0x1000, scoped, tag = 'output window, operand 0, single buffered']
    %12 = vsyncpa [#allocation3], 0
    %13 = vsyncpa [#allocation6], 0
    %14 = vsyncpa [#allocation9], 0
    %15 = vsyncpa [#allocation4], 0
    // Predicated region
    $region2: #{tpu_custom_call.1} parent=1 // pred_check
      _
    $region3: #{tpu_custom_call.1} parent=1 // pred_check_branch
      %17 = sbr.rel (0) target = $region5
    $region4: #{tpu_custom_call.1} parent=1 // pred_region
      %s19 = ssub.s32 1024, 1024
      %20 = vsyncadd [#allocation3], %s19
      %s22 = sshll.u32 [#allocation2], 4
      %s23 = int_to_ptr.vmem [resolvable:$true] %s22
      %25 = dma.hbm_to_vmem [thread:$0]  %s0, 1024, %s23, [#allocation3]
    $region5: #{tpu_custom_call.1} parent=1 // pred_fallthru
      _
    // Predicated region
    $region6: #{tpu_custom_call.1} parent=1 // pred_check
      _
    $region7: #{tpu_custom_call.1} parent=1 // pred_check_branch
      %27 = sbr.rel (0) target = $region9
    $region8: #{tpu_custom_call.1} parent=1 // pred_region
      %s29 = ssub.s32 16384, 16384
      %30 = vsyncadd [#allocation6], %s29
      %s31 = sshll.u32 [#allocation5], 4
      %s32 = int_to_ptr.vmem [resolvable:$true] %s31
      %37 = dma.hbm_to_vmem [thread:$0]  %s1, 16384, %s32, [#allocation6], 128, 128, 8
    $region9: #{tpu_custom_call.1} parent=1 // pred_fallthru
      _
    // Predicated region
    $region10: #{tpu_custom_call.1} parent=1 // pred_check
      _
    $region11: #{tpu_custom_call.1} parent=1 // pred_check_branch
      %39 = sbr.rel (0) target = $region13
    $region12: #{tpu_custom_call.1} parent=1 // pred_region
      _
    $region13: #{tpu_custom_call.1} parent=1 // pred_fallthru
      _
    // Predicated region
    $region14: #{tpu_custom_call.1} parent=1 // pred_check
      _
    $region15: #{tpu_custom_call.1} parent=1 // pred_check_branch
      %41 = sbr.rel (0) target = $region17
    $region16: #{tpu_custom_call.1} parent=1 // pred_region
      %s43 = ssub.s32 2048, 2048
      %44 = vsyncadd [#allocation6], %s43
      %s45 = sshll.u32 [#allocation7], 4
      %s46 = int_to_ptr.vmem [resolvable:$true] %s45
      %51 = dma.hbm_to_vmem [thread:$0]  %s3, 2048, %s46, [#allocation6], 128, 128, 8
    $region17: #{tpu_custom_call.1} parent=1 // pred_fallthru
      _
    // Predicated region
    $region18: #{tpu_custom_call.1} parent=1 // pred_check
      _
    $region19: #{tpu_custom_call.1} parent=1 // pred_check_branch
      %53 = sbr.rel (0) target = $region21
    $region20: #{tpu_custom_call.1} parent=1 // pred_region
      _
    $region21: #{tpu_custom_call.1} parent=1 // pred_fallthru
      _
    // Predicated region
    $region22: #{tpu_custom_call.1} parent=1 // pred_check
      _
    $region23: #{tpu_custom_call.1} parent=1 // pred_check_branch
      %55 = sbr.rel (0) target = $region25
    $region24: #{tpu_custom_call.1} parent=1 // pred_region
      %s57 = ssub.s32 2048, 2048
      %58 = vsyncadd [#allocation9], %s57
      %s59 = sshll.u32 [#allocation8], 4
      %s60 = int_to_ptr.vmem [resolvable:$true] %s59
      %65 = dma.hbm_to_vmem [thread:$0]  %s5, 2048, %s60, [#allocation9], 128, 128, 8
    $region25: #{tpu_custom_call.1} parent=1 // pred_fallthru
      _
    // Predicated region
    $region26: #{tpu_custom_call.1} parent=1 // pred_check
      _
    $region27: #{tpu_custom_call.1} parent=1 // pred_check_branch
      %67 = sbr.rel (0) target = $region29
    $region28: #{tpu_custom_call.1} parent=1 // pred_region
      _
    $region29: #{tpu_custom_call.1} parent=1 // pred_fallthru
      _
    // Predicated region
    $region30: #{tpu_custom_call.1} parent=1 // pred_check
      _
    $region31: #{tpu_custom_call.1} parent=1 // pred_check_branch
      %69 = sbr.rel (0) target = $region33
    $region32: #{tpu_custom_call.1} parent=1 // pred_region
      %70 = dma.done [#allocation3], 1024
    $region33: #{tpu_custom_call.1} parent=1 // pred_fallthru
      _
    // Predicated region
    $region34: #{tpu_custom_call.1} parent=1 // pred_check
      _
    $region35: #{tpu_custom_call.1} parent=1 // pred_check_branch
      %72 = sbr.rel (0) target = $region37
    $region36: #{tpu_custom_call.1} parent=1 // pred_region
      %73 = dma.done [#allocation6], 16384
    $region37: #{tpu_custom_call.1} parent=1 // pred_fallthru
      _
    // Predicated region
    $region38: #{tpu_custom_call.1} parent=1 // pred_check
      _
    $region39: #{tpu_custom_call.1} parent=1 // pred_check_branch
      %75 = sbr.rel (0) target = $region41
    $region40: #{tpu_custom_call.1} parent=1 // pred_region
      %76 = dma.done [#allocation6], 2048
    $region41: #{tpu_custom_call.1} parent=1 // pred_fallthru
      _
    // Predicated region
    $region42: #{tpu_custom_call.1} parent=1 // pred_check
      _
    $region43: #{tpu_custom_call.1} parent=1 // pred_check_branch
      %78 = sbr.rel (0) target = $region45
    $region44: #{tpu_custom_call.1} parent=1 // pred_region
      %79 = dma.done [#allocation9], 2048
    $region45: #{tpu_custom_call.1} parent=1 // pred_fallthru
      _
    %v80 = vld [vmem:[#allocation2] sm:$0xff]
    %v81 = vld [vmem:[#allocation2 + $0x8] sm:$0xff]
    %v82 = vld [vmem:[#allocation2 + $0x10] sm:$0xff]
    %v83 = vld [vmem:[#allocation2 + $0x18] sm:$0xff]
    %v84 = vld [vmem:[#allocation2 + $0x20] sm:$0xff]
    %v85 = vld [vmem:[#allocation2 + $0x28] sm:$0xff]
    %v86 = vld [vmem:[#allocation2 + $0x30] sm:$0xff]
    %v87 = vld [vmem:[#allocation2 + $0x38] sm:$0xff]
    %v88 = vld [vmem:[#allocation5] sm:$0xff]
    %v89 = vld [vmem:[#allocation5 + $0x8] sm:$0xff]
    %v90 = vld [vmem:[#allocation5 + $0x10] sm:$0xff]
    %v91 = vld [vmem:[#allocation5 + $0x18] sm:$0xff]
    %v92 = vld [vmem:[#allocation5 + $0x20] sm:$0xff]
    %v93 = vld [vmem:[#allocation5 + $0x28] sm:$0xff]
    %v94 = vld [vmem:[#allocation5 + $0x30] sm:$0xff]
    %v95 = vld [vmem:[#allocation5 + $0x38] sm:$0xff]
    %v96 = vld [vmem:[#allocation5 + $0x40] sm:$0xff]
    %v97 = vld [vmem:[#allocation5 + $0x48] sm:$0xff]
    %v98 = vld [vmem:[#allocation5 + $0x50] sm:$0xff]
    %v99 = vld [vmem:[#allocation5 + $0x58] sm:$0xff]
    %v100 = vld [vmem:[#allocation5 + $0x60] sm:$0xff]
    %v101 = vld [vmem:[#allocation5 + $0x68] sm:$0xff]
    %v102 = vld [vmem:[#allocation5 + $0x70] sm:$0xff]
    %v103 = vld [vmem:[#allocation5 + $0x78] sm:$0xff]
    %v104 = vld [vmem:[#allocation5 + $0x80] sm:$0xff]
    %v105 = vld [vmem:[#allocation5 + $0x88] sm:$0xff]
    %v106 = vld [vmem:[#allocation5 + $0x90] sm:$0xff]
    %v107 = vld [vmem:[#allocation5 + $0x98] sm:$0xff]
    %v108 = vld [vmem:[#allocation5 + $0xa0] sm:$0xff]
    %v109 = vld [vmem:[#allocation5 + $0xa8] sm:$0xff]
    %v110 = vld [vmem:[#allocation5 + $0xb0] sm:$0xff]
    %v111 = vld [vmem:[#allocation5 + $0xb8] sm:$0xff]
    %v112 = vld [vmem:[#allocation5 + $0xc0] sm:$0xff]
    %v113 = vld [vmem:[#allocation5 + $0xc8] sm:$0xff]
    %v114 = vld [vmem:[#allocation5 + $0xd0] sm:$0xff]
    %v115 = vld [vmem:[#allocation5 + $0xd8] sm:$0xff]
    %v116 = vld [vmem:[#allocation5 + $0xe0] sm:$0xff]
    %v117 = vld [vmem:[#allocation5 + $0xe8] sm:$0xff]
    %v118 = vld [vmem:[#allocation5 + $0xf0] sm:$0xff]
    %v119 = vld [vmem:[#allocation5 + $0xf8] sm:$0xff]
    %v120 = vld [vmem:[#allocation5 + $0x100] sm:$0xff]
    %v121 = vld [vmem:[#allocation5 + $0x108] sm:$0xff]
    %v122 = vld [vmem:[#allocation5 + $0x110] sm:$0xff]
    %v123 = vld [vmem:[#allocation5 + $0x118] sm:$0xff]
    %v124 = vld [vmem:[#allocation5 + $0x120] sm:$0xff]
    %v125 = vld [vmem:[#allocation5 + $0x128] sm:$0xff]
    %v126 = vld [vmem:[#allocation5 + $0x130] sm:$0xff]
    %v127 = vld [vmem:[#allocation5 + $0x138] sm:$0xff]
    %v128 = vld [vmem:[#allocation5 + $0x140] sm:$0xff]
    %v129 = vld [vmem:[#allocation5 + $0x148] sm:$0xff]
    %v130 = vld [vmem:[#allocation5 + $0x150] sm:$0xff]
    %v131 = vld [vmem:[#allocation5 + $0x158] sm:$0xff]
    %v132 = vld [vmem:[#allocation5 + $0x160] sm:$0xff]
    %v133 = vld [vmem:[#allocation5 + $0x168] sm:$0xff]
    %v134 = vld [vmem:[#allocation5 + $0x170] sm:$0xff]
    %v135 = vld [vmem:[#allocation5 + $0x178] sm:$0xff]
    %v136 = vld [vmem:[#allocation5 + $0x180] sm:$0xff]
    %v137 = vld [vmem:[#allocation5 + $0x188] sm:$0xff]
    %v138 = vld [vmem:[#allocation5 + $0x190] sm:$0xff]
    %v139 = vld [vmem:[#allocation5 + $0x198] sm:$0xff]
    %v140 = vld [vmem:[#allocation5 + $0x1a0] sm:$0xff]
    %v141 = vld [vmem:[#allocation5 + $0x1a8] sm:$0xff]
    %v142 = vld [vmem:[#allocation5 + $0x1b0] sm:$0xff]
    %v143 = vld [vmem:[#allocation5 + $0x1b8] sm:$0xff]
    %v144 = vld [vmem:[#allocation5 + $0x1c0] sm:$0xff]
    %v145 = vld [vmem:[#allocation5 + $0x1c8] sm:$0xff]
    %v146 = vld [vmem:[#allocation5 + $0x1d0] sm:$0xff]
    %v147 = vld [vmem:[#allocation5 + $0x1d8] sm:$0xff]
    %v148 = vld [vmem:[#allocation5 + $0x1e0] sm:$0xff]
    %v149 = vld [vmem:[#allocation5 + $0x1e8] sm:$0xff]
    %v150 = vld [vmem:[#allocation5 + $0x1f0] sm:$0xff]
    %v151 = vld [vmem:[#allocation5 + $0x1f8] sm:$0xff]
    %v152 = vld [vmem:[#allocation5 + $0x200] sm:$0xff]
    %v153 = vld [vmem:[#allocation5 + $0x208] sm:$0xff]
    %v154 = vld [vmem:[#allocation5 + $0x210] sm:$0xff]
    %v155 = vld [vmem:[#allocation5 + $0x218] sm:$0xff]
    %v156 = vld [vmem:[#allocation5 + $0x220] sm:$0xff]
    %v157 = vld [vmem:[#allocation5 + $0x228] sm:$0xff]
    %v158 = vld [vmem:[#allocation5 + $0x230] sm:$0xff]
    %v159 = vld [vmem:[#allocation5 + $0x238] sm:$0xff]
    %v160 = vld [vmem:[#allocation5 + $0x240] sm:$0xff]
    %v161 = vld [vmem:[#allocation5 + $0x248] sm:$0xff]
    %v162 = vld [vmem:[#allocation5 + $0x250] sm:$0xff]
    %v163 = vld [vmem:[#allocation5 + $0x258] sm:$0xff]
    %v164 = vld [vmem:[#allocation5 + $0x260] sm:$0xff]
    %v165 = vld [vmem:[#allocation5 + $0x268] sm:$0xff]
    %v166 = vld [vmem:[#allocation5 + $0x270] sm:$0xff]
    %v167 = vld [vmem:[#allocation5 + $0x278] sm:$0xff]
    %v168 = vld [vmem:[#allocation5 + $0x280] sm:$0xff]
    %v169 = vld [vmem:[#allocation5 + $0x288] sm:$0xff]
    %v170 = vld [vmem:[#allocation5 + $0x290] sm:$0xff]
    %v171 = vld [vmem:[#allocation5 + $0x298] sm:$0xff]
    %v172 = vld [vmem:[#allocation5 + $0x2a0] sm:$0xff]
    %v173 = vld [vmem:[#allocation5 + $0x2a8] sm:$0xff]
    %v174 = vld [vmem:[#allocation5 + $0x2b0] sm:$0xff]
    %v175 = vld [vmem:[#allocation5 + $0x2b8] sm:$0xff]
    %v176 = vld [vmem:[#allocation5 + $0x2c0] sm:$0xff]
    %v177 = vld [vmem:[#allocation5 + $0x2c8] sm:$0xff]
    %v178 = vld [vmem:[#allocation5 + $0x2d0] sm:$0xff]
    %v179 = vld [vmem:[#allocation5 + $0x2d8] sm:$0xff]
    %v180 = vld [vmem:[#allocation5 + $0x2e0] sm:$0xff]
    %v181 = vld [vmem:[#allocation5 + $0x2e8] sm:$0xff]
    %v182 = vld [vmem:[#allocation5 + $0x2f0] sm:$0xff]
    %v183 = vld [vmem:[#allocation5 + $0x2f8] sm:$0xff]
    %v184 = vld [vmem:[#allocation5 + $0x300] sm:$0xff]
    %v185 = vld [vmem:[#allocation5 + $0x308] sm:$0xff]
    %v186 = vld [vmem:[#allocation5 + $0x310] sm:$0xff]
    %v187 = vld [vmem:[#allocation5 + $0x318] sm:$0xff]
    %v188 = vld [vmem:[#allocation5 + $0x320] sm:$0xff]
    %v189 = vld [vmem:[#allocation5 + $0x328] sm:$0xff]
    %v190 = vld [vmem:[#allocation5 + $0x330] sm:$0xff]
    %v191 = vld [vmem:[#allocation5 + $0x338] sm:$0xff]
    %v192 = vld [vmem:[#allocation5 + $0x340] sm:$0xff]
    %v193 = vld [vmem:[#allocation5 + $0x348] sm:$0xff]
    %v194 = vld [vmem:[#allocation5 + $0x350] sm:$0xff]
    %v195 = vld [vmem:[#allocation5 + $0x358] sm:$0xff]
    %v196 = vld [vmem:[#allocation5 + $0x360] sm:$0xff]
    %v197 = vld [vmem:[#allocation5 + $0x368] sm:$0xff]
    %v198 = vld [vmem:[#allocation5 + $0x370] sm:$0xff]
    %v199 = vld [vmem:[#allocation5 + $0x378] sm:$0xff]
    %v200 = vld [vmem:[#allocation5 + $0x380] sm:$0xff]
    %v201 = vld [vmem:[#allocation5 + $0x388] sm:$0xff]
    %v202 = vld [vmem:[#allocation5 + $0x390] sm:$0xff]
    %v203 = vld [vmem:[#allocation5 + $0x398] sm:$0xff]
    %v204 = vld [vmem:[#allocation5 + $0x3a0] sm:$0xff]
    %v205 = vld [vmem:[#allocation5 + $0x3a8] sm:$0xff]
    %v206 = vld [vmem:[#allocation5 + $0x3b0] sm:$0xff]
    %v207 = vld [vmem:[#allocation5 + $0x3b8] sm:$0xff]
    %v208 = vld [vmem:[#allocation5 + $0x3c0] sm:$0xff]
    %v209 = vld [vmem:[#allocation5 + $0x3c8] sm:$0xff]
    %v210 = vld [vmem:[#allocation5 + $0x3d0] sm:$0xff]
    %v211 = vld [vmem:[#allocation5 + $0x3d8] sm:$0xff]
    %v212 = vld [vmem:[#allocation5 + $0x3e0] sm:$0xff]
    %v213 = vld [vmem:[#allocation5 + $0x3e8] sm:$0xff]
    %v214 = vld [vmem:[#allocation5 + $0x3f0] sm:$0xff]
    %v215 = vld [vmem:[#allocation5 + $0x3f8] sm:$0xff]
    %v216 = vld [vmem:[%s2] sm:$0x1]
    %v218 = vlaneseq
    %v219 = vshrl.u32 %v218, 7
    %v220 = vsub.s32 0, %v219
    %v221 = vrot.slane %v216, %v220
    %223 = vmatprep.subr.mxu0 0.0
    %224 = vmatpush1.msra.mxu0 %v88
    %225 = vmatprep.subr.mxu0 0.0
    %226 = vmatpush1.msra.mxu0 %v89
    %227 = vmatprep.subr.mxu0 0.0
    %228 = vmatpush1.msra.mxu0 %v90
    %229 = vmatprep.subr.mxu0 0.0
    %230 = vmatpush1.msra.mxu0 %v91
    %231 = vmatprep.subr.mxu0 0.0
    %232 = vmatpush1.msra.mxu0 %v92
    %233 = vmatprep.subr.mxu0 0.0
    %234 = vmatpush1.msra.mxu0 %v93
    %235 = vmatprep.subr.mxu0 0.0
    %236 = vmatpush1.msra.mxu0 %v94
    %237 = vmatprep.subr.mxu0 0.0
    %238 = vmatpush1.msra.mxu0 %v95
    %239 = vmatprep.subr.mxu0 0.0
    %240 = vmatpush1.msra.mxu0 %v96
    %241 = vmatprep.subr.mxu0 0.0
    %242 = vmatpush1.msra.mxu0 %v97
    %243 = vmatprep.subr.mxu0 0.0
    %244 = vmatpush1.msra.mxu0 %v98
    %245 = vmatprep.subr.mxu0 0.0
    %246 = vmatpush1.msra.mxu0 %v99
    %247 = vmatprep.subr.mxu0 0.0
    %248 = vmatpush1.msra.mxu0 %v100
    %249 = vmatprep.subr.mxu0 0.0
    %250 = vmatpush1.msra.mxu0 %v101
    %251 = vmatprep.subr.mxu0 0.0
    %252 = vmatpush1.msra.mxu0 %v102
    %253 = vmatprep.subr.mxu0 0.0
    %254 = vmatpush1.msra.mxu0 %v103
    %255 = vmatprep.subr.mxu0 0.0
    %256 = vmatpush1.msra.mxu0 %v104
    %257 = vmatprep.subr.mxu0 0.0
    %258 = vmatpush1.msra.mxu0 %v105
    %259 = vmatprep.subr.mxu0 0.0
    %260 = vmatpush1.msra.mxu0 %v106
    %261 = vmatprep.subr.mxu0 0.0
    %262 = vmatpush1.msra.mxu0 %v107
    %263 = vmatprep.subr.mxu0 0.0
    %264 = vmatpush1.msra.mxu0 %v108
    %265 = vmatprep.subr.mxu0 0.0
    %266 = vmatpush1.msra.mxu0 %v109
    %267 = vmatprep.subr.mxu0 0.0
    %268 = vmatpush1.msra.mxu0 %v110
    %269 = vmatprep.subr.mxu0 0.0
    %270 = vmatpush1.msra.mxu0 %v111
    %271 = vmatprep.subr.mxu0 0.0
    %272 = vmatpush1.msra.mxu0 %v112
    %273 = vmatprep.subr.mxu0 0.0
    %274 = vmatpush1.msra.mxu0 %v113
    %275 = vmatprep.subr.mxu0 0.0
    %276 = vmatpush1.msra.mxu0 %v114
    %277 = vmatprep.subr.mxu0 0.0
    %278 = vmatpush1.msra.mxu0 %v115
    %279 = vmatprep.subr.mxu0 0.0
    %280 = vmatpush1.msra.mxu0 %v116
    %281 = vmatprep.subr.mxu0 0.0
    %282 = vmatpush1.msra.mxu0 %v117
    %283 = vmatprep.subr.mxu0 0.0
    %284 = vmatpush1.msra.mxu0 %v118
    %285 = vmatprep.subr.mxu0 0.0
    %286 = vmatpush1.msra.mxu0 %v119
    %287 = vmatprep.mubr.f32.mxu0 %v81
    %288 = vmatmul.mubr.f32.gmra.mrb[0].mxu0 %v80
    %v289 = vpop.f32.mrb[0].mxu0
    %v290 = vadd.f32 %v221, %v289
    %v291 = vpop.f32.mrb[0].mxu0
    %292 = vdwg.mxu0
    %293 = vmatprep.subr.mxu0 0.0
    %294 = vmatpush1.msra.mxu0 %v120
    %295 = vmatprep.subr.mxu0 0.0
    %296 = vmatpush1.msra.mxu0 %v121
    %297 = vmatprep.subr.mxu0 0.0
    %298 = vmatpush1.msra.mxu0 %v122
    %299 = vmatprep.subr.mxu0 0.0
    %300 = vmatpush1.msra.mxu0 %v123
    %301 = vmatprep.subr.mxu0 0.0
    %302 = vmatpush1.msra.mxu0 %v124
    %303 = vmatprep.subr.mxu0 0.0
    %304 = vmatpush1.msra.mxu0 %v125
    %305 = vmatprep.subr.mxu0 0.0
    %306 = vmatpush1.msra.mxu0 %v126
    %307 = vmatprep.subr.mxu0 0.0
    %308 = vmatpush1.msra.mxu0 %v127
    %309 = vmatprep.subr.mxu0 0.0
    %310 = vmatpush1.msra.mxu0 %v128
    %311 = vmatprep.subr.mxu0 0.0
    %312 = vmatpush1.msra.mxu0 %v129
    %313 = vmatprep.subr.mxu0 0.0
    %314 = vmatpush1.msra.mxu0 %v130
    %315 = vmatprep.subr.mxu0 0.0
    %316 = vmatpush1.msra.mxu0 %v131
    %317 = vmatprep.subr.mxu0 0.0
    %318 = vmatpush1.msra.mxu0 %v132
    %319 = vmatprep.subr.mxu0 0.0
    %320 = vmatpush1.msra.mxu0 %v133
    %321 = vmatprep.subr.mxu0 0.0
    %322 = vmatpush1.msra.mxu0 %v134
    %323 = vmatprep.subr.mxu0 0.0
    %324 = vmatpush1.msra.mxu0 %v135
    %325 = vmatprep.subr.mxu0 0.0
    %326 = vmatpush1.msra.mxu0 %v136
    %327 = vmatprep.subr.mxu0 0.0
    %328 = vmatpush1.msra.mxu0 %v137
    %329 = vmatprep.subr.mxu0 0.0
    %330 = vmatpush1.msra.mxu0 %v138
    %331 = vmatprep.subr.mxu0 0.0
    %332 = vmatpush1.msra.mxu0 %v139
    %333 = vmatprep.subr.mxu0 0.0
    %334 = vmatpush1.msra.mxu0 %v140
    %335 = vmatprep.subr.mxu0 0.0
    %336 = vmatpush1.msra.mxu0 %v141
    %337 = vmatprep.subr.mxu0 0.0
    %338 = vmatpush1.msra.mxu0 %v142
    %339 = vmatprep.subr.mxu0 0.0
    %340 = vmatpush1.msra.mxu0 %v143
    %341 = vmatprep.subr.mxu0 0.0
    %342 = vmatpush1.msra.mxu0 %v144
    %343 = vmatprep.subr.mxu0 0.0
    %344 = vmatpush1.msra.mxu0 %v145
    %345 = vmatprep.subr.mxu0 0.0
    %346 = vmatpush1.msra.mxu0 %v146
    %347 = vmatprep.subr.mxu0 0.0
    %348 = vmatpush1.msra.mxu0 %v147
    %349 = vmatprep.subr.mxu0 0.0
    %350 = vmatpush1.msra.mxu0 %v148
    %351 = vmatprep.subr.mxu0 0.0
    %352 = vmatpush1.msra.mxu0 %v149
    %353 = vmatprep.subr.mxu0 0.0
    %354 = vmatpush1.msra.mxu0 %v150
    %355 = vmatprep.subr.mxu0 0.0
    %356 = vmatpush1.msra.mxu0 %v151
    %357 = vmatprep.mubr.f32.mxu0 %v83
    %358 = vmatmul.mubr.f32.gmra.mrb[0].mxu0 %v82
    %v359 = vpop.f32.mrb[0].mxu0
    %v360 = vadd.f32 %v290, %v359
    %v361 = vpop.f32.mrb[0].mxu0
    %362 = vdwg.mxu0
    %363 = vmatprep.subr.mxu0 0.0
    %364 = vmatpush1.msra.mxu0 %v152
    %365 = vmatprep.subr.mxu0 0.0
    %366 = vmatpush1.msra.mxu0 %v153
    %367 = vmatprep.subr.mxu0 0.0
    %368 = vmatpush1.msra.mxu0 %v154
    %369 = vmatprep.subr.mxu0 0.0
    %370 = vmatpush1.msra.mxu0 %v155
    %371 = vmatprep.subr.mxu0 0.0
    %372 = vmatpush1.msra.mxu0 %v156
    %373 = vmatprep.subr.mxu0 0.0
    %374 = vmatpush1.msra.mxu0 %v157
    %375 = vmatprep.subr.mxu0 0.0
    %376 = vmatpush1.msra.mxu0 %v158
    %377 = vmatprep.subr.mxu0 0.0
    %378 = vmatpush1.msra.mxu0 %v159
    %379 = vmatprep.subr.mxu0 0.0
    %380 = vmatpush1.msra.mxu0 %v160
    %381 = vmatprep.subr.mxu0 0.0
    %382 = vmatpush1.msra.mxu0 %v161
    %383 = vmatprep.subr.mxu0 0.0
    %384 = vmatpush1.msra.mxu0 %v162
    %385 = vmatprep.subr.mxu0 0.0
    %386 = vmatpush1.msra.mxu0 %v163
    %387 = vmatprep.subr.mxu0 0.0
    %388 = vmatpush1.msra.mxu0 %v164
    %389 = vmatprep.subr.mxu0 0.0
    %390 = vmatpush1.msra.mxu0 %v165
    %391 = vmatprep.subr.mxu0 0.0
    %392 = vmatpush1.msra.mxu0 %v166
    %393 = vmatprep.subr.mxu0 0.0
    %394 = vmatpush1.msra.mxu0 %v167
    %395 = vmatprep.subr.mxu0 0.0
    %396 = vmatpush1.msra.mxu0 %v168
    %397 = vmatprep.subr.mxu0 0.0
    %398 = vmatpush1.msra.mxu0 %v169
    %399 = vmatprep.subr.mxu0 0.0
    %400 = vmatpush1.msra.mxu0 %v170
    %401 = vmatprep.subr.mxu0 0.0
    %402 = vmatpush1.msra.mxu0 %v171
    %403 = vmatprep.subr.mxu0 0.0
    %404 = vmatpush1.msra.mxu0 %v172
    %405 = vmatprep.subr.mxu0 0.0
    %406 = vmatpush1.msra.mxu0 %v173
    %407 = vmatprep.subr.mxu0 0.0
    %408 = vmatpush1.msra.mxu0 %v174
    %409 = vmatprep.subr.mxu0 0.0
    %410 = vmatpush1.msra.mxu0 %v175
    %411 = vmatprep.subr.mxu0 0.0
    %412 = vmatpush1.msra.mxu0 %v176
    %413 = vmatprep.subr.mxu0 0.0
    %414 = vmatpush1.msra.mxu0 %v177
    %415 = vmatprep.subr.mxu0 0.0
    %416 = vmatpush1.msra.mxu0 %v178
    %417 = vmatprep.subr.mxu0 0.0
    %418 = vmatpush1.msra.mxu0 %v179
    %419 = vmatprep.subr.mxu0 0.0
    %420 = vmatpush1.msra.mxu0 %v180
    %421 = vmatprep.subr.mxu0 0.0
    %422 = vmatpush1.msra.mxu0 %v181
    %423 = vmatprep.subr.mxu0 0.0
    %424 = vmatpush1.msra.mxu0 %v182
    %425 = vmatprep.subr.mxu0 0.0
    %426 = vmatpush1.msra.mxu0 %v183
    %427 = vmatprep.mubr.f32.mxu0 %v85
    %428 = vmatmul.mubr.f32.gmra.mrb[0].mxu0 %v84
    %v429 = vpop.f32.mrb[0].mxu0
    %v430 = vadd.f32 %v360, %v429
    %v431 = vpop.f32.mrb[0].mxu0
    %432 = vdwg.mxu0
    %433 = vmatprep.subr.mxu0 0.0
    %434 = vmatpush1.msra.mxu0 %v184
    %435 = vmatprep.subr.mxu0 0.0
    %436 = vmatpush1.msra.mxu0 %v185
    %437 = vmatprep.subr.mxu0 0.0
    %438 = vmatpush1.msra.mxu0 %v186
    %439 = vmatprep.subr.mxu0 0.0
    %440 = vmatpush1.msra.mxu0 %v187
    %441 = vmatprep.subr.mxu0 0.0
    %442 = vmatpush1.msra.mxu0 %v188
    %443 = vmatprep.subr.mxu0 0.0
    %444 = vmatpush1.msra.mxu0 %v189
    %445 = vmatprep.subr.mxu0 0.0
    %446 = vmatpush1.msra.mxu0 %v190
    %447 = vmatprep.subr.mxu0 0.0
    %448 = vmatpush1.msra.mxu0 %v191
    %449 = vmatprep.subr.mxu0 0.0
    %450 = vmatpush1.msra.mxu0 %v192
    %451 = vmatprep.subr.mxu0 0.0
    %452 = vmatpush1.msra.mxu0 %v193
    %453 = vmatprep.subr.mxu0 0.0
    %454 = vmatpush1.msra.mxu0 %v194
    %455 = vmatprep.subr.mxu0 0.0
    %456 = vmatpush1.msra.mxu0 %v195
    %457 = vmatprep.subr.mxu0 0.0
    %458 = vmatpush1.msra.mxu0 %v196
    %459 = vmatprep.subr.mxu0 0.0
    %460 = vmatpush1.msra.mxu0 %v197
    %461 = vmatprep.subr.mxu0 0.0
    %462 = vmatpush1.msra.mxu0 %v198
    %463 = vmatprep.subr.mxu0 0.0
    %464 = vmatpush1.msra.mxu0 %v199
    %465 = vmatprep.subr.mxu0 0.0
    %466 = vmatpush1.msra.mxu0 %v200
    %467 = vmatprep.subr.mxu0 0.0
    %468 = vmatpush1.msra.mxu0 %v201
    %469 = vmatprep.subr.mxu0 0.0
    %470 = vmatpush1.msra.mxu0 %v202
    %471 = vmatprep.subr.mxu0 0.0
    %472 = vmatpush1.msra.mxu0 %v203
    %473 = vmatprep.subr.mxu0 0.0
    %474 = vmatpush1.msra.mxu0 %v204
    %475 = vmatprep.subr.mxu0 0.0
    %476 = vmatpush1.msra.mxu0 %v205
    %477 = vmatprep.subr.mxu0 0.0
    %478 = vmatpush1.msra.mxu0 %v206
    %479 = vmatprep.subr.mxu0 0.0
    %480 = vmatpush1.msra.mxu0 %v207
    %481 = vmatprep.subr.mxu0 0.0
    %482 = vmatpush1.msra.mxu0 %v208
    %483 = vmatprep.subr.mxu0 0.0
    %484 = vmatpush1.msra.mxu0 %v209
    %485 = vmatprep.subr.mxu0 0.0
    %486 = vmatpush1.msra.mxu0 %v210
    %487 = vmatprep.subr.mxu0 0.0
    %488 = vmatpush1.msra.mxu0 %v211
    %489 = vmatprep.subr.mxu0 0.0
    %490 = vmatpush1.msra.mxu0 %v212
    %491 = vmatprep.subr.mxu0 0.0
    %492 = vmatpush1.msra.mxu0 %v213
    %493 = vmatprep.subr.mxu0 0.0
    %494 = vmatpush1.msra.mxu0 %v214
    %495 = vmatprep.subr.mxu0 0.0
    %496 = vmatpush1.msra.mxu0 %v215
    %497 = vmatprep.mubr.f32.mxu0 %v87
    %498 = vmatmul.mubr.f32.gmra.mrb[0].mxu0 %v86
    %v499 = vpop.f32.mrb[0].mxu0
    %v500 = vadd.f32 %v430, %v499
    %v501 = vpop.f32.mrb[0].mxu0
    %502 = vdwg.mxu0
    %v503 = vmul.f32 %v500, 0.5
    %v504 = vmul.f32 %v500, 0.70710677
    %v505 = verf.f32.pop %v504
    %v506 = vadd.f32 %v505, 1.0
    %v507 = vmul.f32 %v503, %v506
    %v508 = vld [vmem:[#allocation7] sm:$0xff]
    %v509 = vld [vmem:[#allocation7 + $0x8] sm:$0xff]
    %v510 = vld [vmem:[#allocation7 + $0x10] sm:$0xff]
    %v511 = vld [vmem:[#allocation7 + $0x18] sm:$0xff]
    %v512 = vld [vmem:[#allocation7 + $0x20] sm:$0xff]
    %v513 = vld [vmem:[#allocation7 + $0x28] sm:$0xff]
    %v514 = vld [vmem:[#allocation7 + $0x30] sm:$0xff]
    %v515 = vld [vmem:[#allocation7 + $0x38] sm:$0xff]
    %v516 = vld [vmem:[#allocation7 + $0x40] sm:$0xff]
    %v517 = vld [vmem:[#allocation7 + $0x48] sm:$0xff]
    %v518 = vld [vmem:[#allocation7 + $0x50] sm:$0xff]
    %v519 = vld [vmem:[#allocation7 + $0x58] sm:$0xff]
    %v520 = vld [vmem:[#allocation7 + $0x60] sm:$0xff]
    %v521 = vld [vmem:[#allocation7 + $0x68] sm:$0xff]
    %v522 = vld [vmem:[#allocation7 + $0x70] sm:$0xff]
    %v523 = vld [vmem:[#allocation7 + $0x78] sm:$0xff]
    %v524 = vld [vmem:[%s4] sm:$0x1]
    %v526 = vlaneseq
    %v527 = vshrl.u32 %v526, 7
    %v528 = vsub.s32 0, %v527
    %v529 = vrot.slane %v524, %v528
    %531 = vmatprep.subr.mxu0 0.0
    %532 = vmatpush1.msra.mxu0 %v508
    %533 = vmatprep.subr.mxu0 0.0
    %534 = vmatpush1.msra.mxu0 %v509
    %535 = vmatprep.subr.mxu0 0.0
    %536 = vmatpush1.msra.mxu0 %v510
    %537 = vmatprep.subr.mxu0 0.0
    %538 = vmatpush1.msra.mxu0 %v511
    %539 = vmatprep.subr.mxu0 0.0
    %540 = vmatpush1.msra.mxu0 %v512
    %541 = vmatprep.subr.mxu0 0.0
    %542 = vmatpush1.msra.mxu0 %v513
    %543 = vmatprep.subr.mxu0 0.0
    %544 = vmatpush1.msra.mxu0 %v514
    %545 = vmatprep.subr.mxu0 0.0
    %546 = vmatpush1.msra.mxu0 %v515
    %547 = vmatprep.subr.mxu0 0.0
    %548 = vmatpush1.msra.mxu0 %v516
    %549 = vmatprep.subr.mxu0 0.0
    %550 = vmatpush1.msra.mxu0 %v517
    %551 = vmatprep.subr.mxu0 0.0
    %552 = vmatpush1.msra.mxu0 %v518
    %553 = vmatprep.subr.mxu0 0.0
    %554 = vmatpush1.msra.mxu0 %v519
    %555 = vmatprep.subr.mxu0 0.0
    %556 = vmatpush1.msra.mxu0 %v520
    %557 = vmatprep.subr.mxu0 0.0
    %558 = vmatpush1.msra.mxu0 %v521
    %559 = vmatprep.subr.mxu0 0.0
    %560 = vmatpush1.msra.mxu0 %v522
    %561 = vmatprep.subr.mxu0 0.0
    %562 = vmatpush1.msra.mxu0 %v523
    %563 = vmatprep.subr.mxu0 0.0
    %564 = vmatpush1.msra.mxu0 0.0
    %565 = vmatprep.subr.mxu0 0.0
    %566 = vmatpush1.msra.mxu0 0.0
    %567 = vmatprep.subr.mxu0 0.0
    %568 = vmatpush1.msra.mxu0 0.0
    %569 = vmatprep.subr.mxu0 0.0
    %570 = vmatpush1.msra.mxu0 0.0
    %571 = vmatprep.subr.mxu0 0.0
    %572 = vmatpush1.msra.mxu0 0.0
    %573 = vmatprep.subr.mxu0 0.0
    %574 = vmatpush1.msra.mxu0 0.0
    %575 = vmatprep.subr.mxu0 0.0
    %576 = vmatpush1.msra.mxu0 0.0
    %577 = vmatprep.subr.mxu0 0.0
    %578 = vmatpush1.msra.mxu0 0.0
    %579 = vmatprep.subr.mxu0 0.0
    %580 = vmatpush1.msra.mxu0 0.0
    %581 = vmatprep.subr.mxu0 0.0
    %582 = vmatpush1.msra.mxu0 0.0
    %583 = vmatprep.subr.mxu0 0.0
    %584 = vmatpush1.msra.mxu0 0.0
    %585 = vmatprep.subr.mxu0 0.0
    %586 = vmatpush1.msra.mxu0 0.0
    %587 = vmatprep.subr.mxu0 0.0
    %588 = vmatpush1.msra.mxu0 0.0
    %589 = vmatprep.subr.mxu0 0.0
    %590 = vmatpush1.msra.mxu0 0.0
    %591 = vmatprep.subr.mxu0 0.0
    %592 = vmatpush1.msra.mxu0 0.0
    %593 = vmatprep.subr.mxu0 0.0
    %594 = vmatpush1.msra.mxu0 0.0
    %595 = vmatprep.mubr.f32.mxu0 0.0
    %596 = vmatmul.mubr.f32.gmra.mrb[0].mxu0 %v507
    %v597 = vpop.f32.mrb[0].mxu0
    %v598 = vadd.f32 %v529, %v597
    %v599 = vpop.f32.mrb[0].mxu0
    %600 = vdwg.mxu0
    %v601 = vmul.f32 %v598, 0.5
    %v602 = vmul.f32 %v598, 0.70710677
    %v603 = verf.f32.pop %v602
    %v604 = vadd.f32 %v603, 1.0
    %v605 = vmul.f32 %v601, %v604
    %v606 = vld [vmem:[#allocation8] sm:$0xff]
    %v607 = vld [vmem:[#allocation8 + $0x8] sm:$0xff]
    %v608 = vld [vmem:[#allocation8 + $0x10] sm:$0xff]
    %v609 = vld [vmem:[#allocation8 + $0x18] sm:$0xff]
    %v610 = vld [vmem:[#allocation8 + $0x20] sm:$0xff]
    %v611 = vld [vmem:[#allocation8 + $0x28] sm:$0xff]
    %v612 = vld [vmem:[#allocation8 + $0x30] sm:$0xff]
    %v613 = vld [vmem:[#allocation8 + $0x38] sm:$0xff]
    %v614 = vld [vmem:[#allocation8 + $0x40] sm:$0xff]
    %v615 = vld [vmem:[#allocation8 + $0x48] sm:$0xff]
    %v616 = vld [vmem:[#allocation8 + $0x50] sm:$0xff]
    %v617 = vld [vmem:[#allocation8 + $0x58] sm:$0xff]
    %v618 = vld [vmem:[#allocation8 + $0x60] sm:$0xff]
    %v619 = vld [vmem:[#allocation8 + $0x68] sm:$0xff]
    %v620 = vld [vmem:[#allocation8 + $0x70] sm:$0xff]
    %v621 = vld [vmem:[#allocation8 + $0x78] sm:$0xff]
    %v622 = vld [vmem:[%s6] sm:$0x1]
    %v624 = vlaneseq
    %v625 = vshrl.u32 %v624, 7
    %v626 = vsub.s32 0, %v625
    %v627 = vrot.slane %v622, %v626
    %629 = vmatprep.subr.mxu0 0.0
    %630 = vmatpush1.msra.mxu0 %v606
    %631 = vmatprep.subr.mxu0 0.0
    %632 = vmatpush1.msra.mxu0 %v607
    %633 = vmatprep.subr.mxu0 0.0
    %634 = vmatpush1.msra.mxu0 %v608
    %635 = vmatprep.subr.mxu0 0.0
    %636 = vmatpush1.msra.mxu0 %v609
    %637 = vmatprep.subr.mxu0 0.0
    %638 = vmatpush1.msra.mxu0 %v610
    %639 = vmatprep.subr.mxu0 0.0
    %640 = vmatpush1.msra.mxu0 %v611
    %641 = vmatprep.subr.mxu0 0.0
    %642 = vmatpush1.msra.mxu0 %v612
    %643 = vmatprep.subr.mxu0 0.0
    %644 = vmatpush1.msra.mxu0 %v613
    %645 = vmatprep.subr.mxu0 0.0
    %646 = vmatpush1.msra.mxu0 %v614
    %647 = vmatprep.subr.mxu0 0.0
    %648 = vmatpush1.msra.mxu0 %v615
    %649 = vmatprep.subr.mxu0 0.0
    %650 = vmatpush1.msra.mxu0 %v616
    %651 = vmatprep.subr.mxu0 0.0
    %652 = vmatpush1.msra.mxu0 %v617
    %653 = vmatprep.subr.mxu0 0.0
    %654 = vmatpush1.msra.mxu0 %v618
    %655 = vmatprep.subr.mxu0 0.0
    %656 = vmatpush1.msra.mxu0 %v619
    %657 = vmatprep.subr.mxu0 0.0
    %658 = vmatpush1.msra.mxu0 %v620
    %659 = vmatprep.subr.mxu0 0.0
    %660 = vmatpush1.msra.mxu0 %v621
    %661 = vmatprep.subr.mxu0 0.0
    %662 = vmatpush1.msra.mxu0 0.0
    %663 = vmatprep.subr.mxu0 0.0
    %664 = vmatpush1.msra.mxu0 0.0
    %665 = vmatprep.subr.mxu0 0.0
    %666 = vmatpush1.msra.mxu0 0.0
    %667 = vmatprep.subr.mxu0 0.0
    %668 = vmatpush1.msra.mxu0 0.0
    %669 = vmatprep.subr.mxu0 0.0
    %670 = vmatpush1.msra.mxu0 0.0
    %671 = vmatprep.subr.mxu0 0.0
    %672 = vmatpush1.msra.mxu0 0.0
    %673 = vmatprep.subr.mxu0 0.0
    %674 = vmatpush1.msra.mxu0 0.0
    %675 = vmatprep.subr.mxu0 0.0
    %676 = vmatpush1.msra.mxu0 0.0
    %677 = vmatprep.subr.mxu0 0.0
    %678 = vmatpush1.msra.mxu0 0.0
    %679 = vmatprep.subr.mxu0 0.0
    %680 = vmatpush1.msra.mxu0 0.0
    %681 = vmatprep.subr.mxu0 0.0
    %682 = vmatpush1.msra.mxu0 0.0
    %683 = vmatprep.subr.mxu0 0.0
    %684 = vmatpush1.msra.mxu0 0.0
    %685 = vmatprep.subr.mxu0 0.0
    %686 = vmatpush1.msra.mxu0 0.0
    %687 = vmatprep.subr.mxu0 0.0
    %688 = vmatpush1.msra.mxu0 0.0
    %689 = vmatprep.subr.mxu0 0.0
    %690 = vmatpush1.msra.mxu0 0.0
    %691 = vmatprep.subr.mxu0 0.0
    %692 = vmatpush1.msra.mxu0 0.0
    %693 = vmatprep.mubr.f32.mxu0 0.0
    %694 = vmatmul.mubr.f32.gmra.mrb[0].mxu0 %v605
    %v695 = vpop.f32.mrb[0].mxu0
    %v696 = vadd.f32 %v627, %v695
    %v697 = vpop.f32.mrb[0].mxu0
    %698 = vdwg.mxu0
    %699 = vst [vmem:[#allocation10] sm:$0xff] %v696
    // Predicated region
    $region46: #{tpu_custom_call.1} parent=1 // pred_check
      _
    $region47: #{tpu_custom_call.1} parent=1 // pred_check_branch
      %701 = sbr.rel (0) target = $region49
    $region48: #{tpu_custom_call.1} parent=1 // pred_region
      %s703 = ssub.s32 128, 128
      %704 = vsyncadd [#allocation4], %s703
      %s706 = sshll.u32 [#allocation10], 4
      %s707 = int_to_ptr.vmem [resolvable:$true] %s706
      %709 = dma.vmem_to_hbm [thread:$0]  %s707, 128, %s7, [#allocation4]
    $region49: #{tpu_custom_call.1} parent=1 // pred_fallthru
      _
    // Predicated region
    $region50: #{tpu_custom_call.1} parent=1 // pred_check
      _
    $region51: #{tpu_custom_call.1} parent=1 // pred_check_branch
      %711 = sbr.rel (0) target = $region53
    $region52: #{tpu_custom_call.1} parent=1 // pred_region
      %712 = dma.done [#allocation4], 128
    $region53: #{tpu_custom_call.1} parent=1 // pred_fallthru
      _
    %713 = vsyncpa [#allocation3], 1
    %714 = vsyncpa [#allocation6], 1
    %715 = vsyncpa [#allocation9], 1
    %716 = vsyncpa [#allocation4], 1

</llo_original>
